<compile_context>
chip_gen: v7x
topology: tpu7x:2x2x1
jax: 0.10.0
libtpu: 0.0.40
codegen_flags: <defaults>
</compile_context>

<pallas_src>
import functools

import jax
import jax.numpy as jnp
from jax import lax
from jax.experimental import pallas as pl
from jax.experimental.pallas import tpu as pltpu


def _lane_roll(v, shift):
    """np.roll along the last (lane) axis; shift normalized to [0, n)."""
    n = v.shape[-1]
    shift = shift % n
    if shift == 0:
        return v
    return pltpu.roll(v, shift, axis=v.ndim - 1)


def _tiled_conv2d_kernel(x_ref, w_ref, o_ref, *, width):
    # x_ref: (1, Cin, H*W)   one batch element, flattened NCHW (row-major H,W)
    # w_ref: (9, Cout, Cin)  tap t = kh*3 + kw holds weight[:, :, kh, kw]
    # o_ref: (1, Cout, H*W)  lane-dense output, already NCHW-flat order
    _, cin, hw = x_ref.shape
    cout = o_ref.shape[1]
    x = x_ref[0]                                               # (Cin, H*W)

    # Column (w) index of every flattened pixel -- the W-direction circular
    # shift must wrap inside its own row, not into the neighboring row.
    col = lax.broadcasted_iota(jnp.int32, (cin, hw), 1) % width

    # Three W-direction circular shifts (kw = 0, 1, 2 <-> dw = -1, 0, +1).
    x_w = (
        jnp.where(col == 0,
                  _lane_roll(x, -(width - 1)), _lane_roll(x, 1)),     # dw = -1
        x,                                                            # dw =  0
        jnp.where(col == width - 1,
                  _lane_roll(x, width - 1), _lane_roll(x, -1)),       # dw = +1
    )

    # 9 accumulated MXU matmuls: (Cout, Cin) @ (Cin, H*W) -> (Cout, H*W).
    # (For large Cin (>=32) a single packed K=9*Cin matmul becomes worthwhile;
    #  at Cin=4 the accumulate form avoids all relayouts and is cheaper.)
    acc = jnp.zeros((cout, hw), jnp.float32)
    for kh in range(3):
        # dh = kh - 1; a flat lane roll by -dh*W is exactly the circular H shift.
        h_shift = -(kh - 1) * width
        for kw in range(3):
            tap = _lane_roll(x_w[kw], h_shift)
            acc = acc + jnp.dot(w_ref[kh * 3 + kw], tap,
                                preferred_element_type=jnp.float32)

    # Full-width (Cout, H*W) store: 256 dense lanes, unmasked vst, NCHW order.
    o_ref[0] = acc.astype(o_ref.dtype)


def tiled_conv2d(x_nchw, weight_oihw):
    """Equivalent of conv2d(F.pad(x, [1,1,1,1], mode='circular'), weight, bias=None)."""
    n, cin, h, w = x_nchw.shape
    cout = weight_oihw.shape[0]
    hw = h * w

    # Free contiguous reshape of the NCHW tensor -- no wrapper transpose at all.
    x_flat = x_nchw.reshape(n, cin, hw)
    # (Cout, Cin, 3, 3) -> (3, 3, Cout, Cin) -> (9, Cout, Cin); tiny (9*Cout*Cin).
    w_taps = jnp.transpose(weight_oihw, (2, 3, 0, 1)).reshape(9, cout, cin)

    kernel = functools.partial(_tiled_conv2d_kernel, width=w)
    out_flat = pl.pallas_call(
        kernel,
        out_shape=jax.ShapeDtypeStruct((n, cout, hw), x_nchw.dtype),
        grid=(n,),
        in_specs=[
            pl.BlockSpec((1, cin, hw), lambda b: (b, 0, 0)),
            pl.BlockSpec((9, cout, cin), lambda b: (0, 0, 0)),  # weight resident
        ],
        out_specs=pl.BlockSpec((1, cout, hw), lambda b: (b, 0, 0)),
        compiler_params=pltpu.CompilerParams(dimension_semantics=("parallel",)),
    )(x_flat, w_taps)

    # (N, Cout, H*W) -> (N, Cout, H, W): contiguous reshape, no data movement.
    return out_flat.reshape(n, cout, h, w)


def reference_conv(x_nchw, weight_oihw):
    x_pad = jnp.pad(x_nchw, ((0, 0), (0, 0), (1, 1), (1, 1)), mode="wrap")
    return lax.conv_general_dilated(
        x_pad, weight_oihw, window_strides=(1, 1), padding="VALID",
        dimension_numbers=("NCHW", "OIHW", "NCHW"))


if __name__ == "__main__":
    # Small deterministic shapes: batch=2, in_features=4, out_features=8, spatial=16.
    N, CIN, COUT, H, W = 2, 4, 8, 16, 16

    key = jax.random.PRNGKey(0)
    kx, kw_key = jax.random.split(key)
    x = jax.random.normal(kx, (N, CIN, H, W), dtype=jnp.float32)
    # Conv2d weight (out_features, in_features, 3, 3), roughly fan_in-scaled.
    fan_in = CIN * 3 * 3
    weight = jax.random.normal(kw_key, (COUT, CIN, 3, 3), dtype=jnp.float32) / jnp.sqrt(fan_in)

    out = jax.block_until_ready(tiled_conv2d(x, weight))
    ref = jax.block_until_ready(reference_conv(x, weight))

    assert out.shape == (N, COUT, H, W), out.shape
    max_err = float(jnp.max(jnp.abs(out - ref)))
    assert jnp.allclose(out, ref, atol=2e-5, rtol=2e-5), max_err

    print("KERNEL_OK")
</pallas_src>

<mosaic_0001>
module attributes {stable_mosaic.version = 11 : i64} {
  func.func @_tiled_conv2d_kernel(%arg0: i32, %arg1: memref<1x4x256xf32, #tpu.memory_space<vmem>>, %arg2: memref<9x8x4xf32, #tpu.memory_space<vmem>>, %arg3: memref<1x8x256xf32, #tpu.memory_space<vmem>>) attributes {dimension_semantics = [#tpu.dimension_semantics<parallel>], iteration_bounds = array<i64: 2>, scalar_prefetch = 0 : i64, scratch_operands = 0 : i64, tpu.core_type = #tpu.core_type<tc>, window_params = [{transform_indices = @transform_0, window_bounds = array<i64: 1, 4, 256>}, {pipeline_mode = #tpu.pipeline_mode<synchronous>, transform_indices = @transform_1, window_bounds = array<i64: 9, 8, 4>}, {transform_indices = @transform_2, window_bounds = array<i64: 1, 8, 256>}]} {
    %c0 = arith.constant 0 : index
    %c0_0 = arith.constant 0 : index
    %c0_1 = arith.constant 0 : index
    %0 = vector.load %arg1[%c0, %c0_0, %c0_1] : memref<1x4x256xf32, #tpu.memory_space<vmem>>, vector<1x4x256xf32>
    %1 = vector.shape_cast %0 : vector<1x4x256xf32> to vector<4x256xf32>
    %2 = tpu.iota {dimensions = array<i32: 1>} : vector<4x256xi32>
    %c16_i32 = arith.constant 16 : i32
    %c0_i32 = arith.constant 0 : i32
    %3 = arith.cmpi eq, %c16_i32, %c0_i32 : i32
    %c1_i32 = arith.constant 1 : i32
    %4 = arith.select %3, %c1_i32, %c16_i32 : i32
    %5 = vector.broadcast %4 : i32 to vector<4x256xi32>
    %6 = arith.remsi %2, %5 : vector<4x256xi32>
    %c0_i32_2 = arith.constant 0 : i32
    %7 = vector.broadcast %c0_i32_2 : i32 to vector<4x256xi32>
    %8 = arith.cmpi ne, %6, %7 : vector<4x256xi32>
    %c0_i32_3 = arith.constant 0 : i32
    %9 = vector.broadcast %c0_i32_3 : i32 to vector<4x256xi32>
    %10 = arith.cmpi slt, %6, %9 : vector<4x256xi32>
    %c0_i32_4 = arith.constant 0 : i32
    %11 = arith.cmpi slt, %4, %c0_i32_4 : i32
    %12 = vector.broadcast %11 : i1 to vector<4x256xi1>
    %13 = vector.broadcast %12 : vector<4x256xi1> to vector<4x256xi1>
    %14 = arith.xori %10, %13 : vector<4x256xi1>
    %15 = arith.andi %14, %8 : vector<4x256xi1>
    %16 = vector.broadcast %4 : i32 to vector<4x256xi32>
    %17 = arith.addi %6, %16 : vector<4x256xi32>
    %18 = arith.select %15, %17, %6 : vector<4x256xi1>, vector<4x256xi32>
    %c0_i32_5 = arith.constant 0 : i32
    %19 = vector.broadcast %c0_i32_5 : i32 to vector<4x256xi32>
    %20 = arith.cmpi eq, %18, %19 : vector<4x256xi32>
    %c241_i32 = arith.constant 241 : i32
    %21 = tpu.dynamic_rotate %1 by %c241_i32 dim 1 : vector<4x256xf32>, i32 -> vector<4x256xf32>
    %c1_i32_6 = arith.constant 1 : i32
    %22 = tpu.dynamic_rotate %1 by %c1_i32_6 dim 1 : vector<4x256xf32>, i32 -> vector<4x256xf32>
    %23 = arith.select %20, %21, %22 : vector<4x256xi1>, vector<4x256xf32>
    %c15_i32 = arith.constant 15 : i32
    %24 = vector.broadcast %c15_i32 : i32 to vector<4x256xi32>
    %25 = arith.cmpi eq, %18, %24 : vector<4x256xi32>
    %c15_i32_7 = arith.constant 15 : i32
    %26 = tpu.dynamic_rotate %1 by %c15_i32_7 dim 1 : vector<4x256xf32>, i32 -> vector<4x256xf32>
    %c255_i32 = arith.constant 255 : i32
    %27 = tpu.dynamic_rotate %1 by %c255_i32 dim 1 : vector<4x256xf32>, i32 -> vector<4x256xf32>
    %28 = arith.select %25, %26, %27 : vector<4x256xi1>, vector<4x256xf32>
    %cst = arith.constant 0.000000e+00 : f32
    %29 = vector.broadcast %cst : f32 to vector<8x256xf32>
    %c16_i32_8 = arith.constant 16 : i32
    %30 = tpu.dynamic_rotate %23 by %c16_i32_8 dim 1 : vector<4x256xf32>, i32 -> vector<4x256xf32>
    %c0_9 = arith.constant 0 : index
    %c0_10 = arith.constant 0 : index
    %c0_11 = arith.constant 0 : index
    %31 = vector.load %arg2[%c0_9, %c0_10, %c0_11] : memref<9x8x4xf32, #tpu.memory_space<vmem>>, vector<1x8x4xf32>
    %32 = vector.shape_cast %31 : vector<1x8x4xf32> to vector<8x4xf32>
    %cst_12 = arith.constant dense<0.000000e+00> : vector<8x256xf32>
    %33 = tpu.matmul %32, %30, %cst_12 {dimension_numbers = #tpu.dot_dimension_numbers<[1], [0], [0], [1], [0, 0, 1, 1], [], []>} : vector<8x4xf32>, vector<4x256xf32>, vector<8x256xf32> -> vector<8x256xf32>
    %34 = arith.addf %29, %33 : vector<8x256xf32>
    %c16_i32_13 = arith.constant 16 : i32
    %35 = tpu.dynamic_rotate %1 by %c16_i32_13 dim 1 : vector<4x256xf32>, i32 -> vector<4x256xf32>
    %c1 = arith.constant 1 : index
    %c0_14 = arith.constant 0 : index
    %c0_15 = arith.constant 0 : index
    %36 = vector.load %arg2[%c1, %c0_14, %c0_15] : memref<9x8x4xf32, #tpu.memory_space<vmem>>, vector<1x8x4xf32>
    %37 = vector.shape_cast %36 : vector<1x8x4xf32> to vector<8x4xf32>
    %cst_16 = arith.constant dense<0.000000e+00> : vector<8x256xf32>
    %38 = tpu.matmul %37, %35, %cst_16 {dimension_numbers = #tpu.dot_dimension_numbers<[1], [0], [0], [1], [0, 0, 1, 1], [], []>} : vector<8x4xf32>, vector<4x256xf32>, vector<8x256xf32> -> vector<8x256xf32>
    %39 = arith.addf %34, %38 : vector<8x256xf32>
    %c16_i32_17 = arith.constant 16 : i32
    %40 = tpu.dynamic_rotate %28 by %c16_i32_17 dim 1 : vector<4x256xf32>, i32 -> vector<4x256xf32>
    %c2 = arith.constant 2 : index
    %c0_18 = arith.constant 0 : index
    %c0_19 = arith.constant 0 : index
    %41 = vector.load %arg2[%c2, %c0_18, %c0_19] : memref<9x8x4xf32, #tpu.memory_space<vmem>>, vector<1x8x4xf32>
    %42 = vector.shape_cast %41 : vector<1x8x4xf32> to vector<8x4xf32>
    %cst_20 = arith.constant dense<0.000000e+00> : vector<8x256xf32>
    %43 = tpu.matmul %42, %40, %cst_20 {dimension_numbers = #tpu.dot_dimension_numbers<[1], [0], [0], [1], [0, 0, 1, 1], [], []>} : vector<8x4xf32>, vector<4x256xf32>, vector<8x256xf32> -> vector<8x256xf32>
    %44 = arith.addf %39, %43 : vector<8x256xf32>
    %c3 = arith.constant 3 : index
    %c0_21 = arith.constant 0 : index
    %c0_22 = arith.constant 0 : index
    %45 = vector.load %arg2[%c3, %c0_21, %c0_22] : memref<9x8x4xf32, #tpu.memory_space<vmem>>, vector<1x8x4xf32>
    %46 = vector.shape_cast %45 : vector<1x8x4xf32> to vector<8x4xf32>
    %cst_23 = arith.constant dense<0.000000e+00> : vector<8x256xf32>
    %47 = tpu.matmul %46, %23, %cst_23 {dimension_numbers = #tpu.dot_dimension_numbers<[1], [0], [0], [1], [0, 0, 1, 1], [], []>} : vector<8x4xf32>, vector<4x256xf32>, vector<8x256xf32> -> vector<8x256xf32>
    %48 = arith.addf %44, %47 : vector<8x256xf32>
    %c4 = arith.constant 4 : index
    %c0_24 = arith.constant 0 : index
    %c0_25 = arith.constant 0 : index
    %49 = vector.load %arg2[%c4, %c0_24, %c0_25] : memref<9x8x4xf32, #tpu.memory_space<vmem>>, vector<1x8x4xf32>
    %50 = vector.shape_cast %49 : vector<1x8x4xf32> to vector<8x4xf32>
    %cst_26 = arith.constant dense<0.000000e+00> : vector<8x256xf32>
    %51 = tpu.matmul %50, %1, %cst_26 {dimension_numbers = #tpu.dot_dimension_numbers<[1], [0], [0], [1], [0, 0, 1, 1], [], []>} : vector<8x4xf32>, vector<4x256xf32>, vector<8x256xf32> -> vector<8x256xf32>
    %52 = arith.addf %48, %51 : vector<8x256xf32>
    %c5 = arith.constant 5 : index
    %c0_27 = arith.constant 0 : index
    %c0_28 = arith.constant 0 : index
    %53 = vector.load %arg2[%c5, %c0_27, %c0_28] : memref<9x8x4xf32, #tpu.memory_space<vmem>>, vector<1x8x4xf32>
    %54 = vector.shape_cast %53 : vector<1x8x4xf32> to vector<8x4xf32>
    %cst_29 = arith.constant dense<0.000000e+00> : vector<8x256xf32>
    %55 = tpu.matmul %54, %28, %cst_29 {dimension_numbers = #tpu.dot_dimension_numbers<[1], [0], [0], [1], [0, 0, 1, 1], [], []>} : vector<8x4xf32>, vector<4x256xf32>, vector<8x256xf32> -> vector<8x256xf32>
    %56 = arith.addf %52, %55 : vector<8x256xf32>
    %c240_i32 = arith.constant 240 : i32
    %57 = tpu.dynamic_rotate %23 by %c240_i32 dim 1 : vector<4x256xf32>, i32 -> vector<4x256xf32>
    %c6 = arith.constant 6 : index
    %c0_30 = arith.constant 0 : index
    %c0_31 = arith.constant 0 : index
    %58 = vector.load %arg2[%c6, %c0_30, %c0_31] : memref<9x8x4xf32, #tpu.memory_space<vmem>>, vector<1x8x4xf32>
    %59 = vector.shape_cast %58 : vector<1x8x4xf32> to vector<8x4xf32>
    %cst_32 = arith.constant dense<0.000000e+00> : vector<8x256xf32>
    %60 = tpu.matmul %59, %57, %cst_32 {dimension_numbers = #tpu.dot_dimension_numbers<[1], [0], [0], [1], [0, 0, 1, 1], [], []>} : vector<8x4xf32>, vector<4x256xf32>, vector<8x256xf32> -> vector<8x256xf32>
    %61 = arith.addf %56, %60 : vector<8x256xf32>
    %c240_i32_33 = arith.constant 240 : i32
    %62 = tpu.dynamic_rotate %1 by %c240_i32_33 dim 1 : vector<4x256xf32>, i32 -> vector<4x256xf32>
    %c7 = arith.constant 7 : index
    %c0_34 = arith.constant 0 : index
    %c0_35 = arith.constant 0 : index
    %63 = vector.load %arg2[%c7, %c0_34, %c0_35] : memref<9x8x4xf32, #tpu.memory_space<vmem>>, vector<1x8x4xf32>
    %64 = vector.shape_cast %63 : vector<1x8x4xf32> to vector<8x4xf32>
    %cst_36 = arith.constant dense<0.000000e+00> : vector<8x256xf32>
    %65 = tpu.matmul %64, %62, %cst_36 {dimension_numbers = #tpu.dot_dimension_numbers<[1], [0], [0], [1], [0, 0, 1, 1], [], []>} : vector<8x4xf32>, vector<4x256xf32>, vector<8x256xf32> -> vector<8x256xf32>
    %66 = arith.addf %61, %65 : vector<8x256xf32>
    %c240_i32_37 = arith.constant 240 : i32
    %67 = tpu.dynamic_rotate %28 by %c240_i32_37 dim 1 : vector<4x256xf32>, i32 -> vector<4x256xf32>
    %c8 = arith.constant 8 : index
    %c0_38 = arith.constant 0 : index
    %c0_39 = arith.constant 0 : index
    %68 = vector.load %arg2[%c8, %c0_38, %c0_39] : memref<9x8x4xf32, #tpu.memory_space<vmem>>, vector<1x8x4xf32>
    %69 = vector.shape_cast %68 : vector<1x8x4xf32> to vector<8x4xf32>
    %cst_40 = arith.constant dense<0.000000e+00> : vector<8x256xf32>
    %70 = tpu.matmul %69, %67, %cst_40 {dimension_numbers = #tpu.dot_dimension_numbers<[1], [0], [0], [1], [0, 0, 1, 1], [], []>} : vector<8x4xf32>, vector<4x256xf32>, vector<8x256xf32> -> vector<8x256xf32>
    %71 = arith.addf %66, %70 : vector<8x256xf32>
    %c0_41 = arith.constant 0 : index
    %c0_42 = arith.constant 0 : index
    %c0_43 = arith.constant 0 : index
    %72 = vector.load %arg3[%c0_41, %c0_42, %c0_43] : memref<1x8x256xf32, #tpu.memory_space<vmem>>, vector<1x8x256xf32>
    %73 = vector.shape_cast %72 : vector<1x8x256xf32> to vector<8x256xf32>
    %74 = vector.shape_cast %71 : vector<8x256xf32> to vector<1x8x256xf32>
    tpu.vector_store %arg3[%c0_41, %c0_42, %c0_43], %74 {strides = array<i32>} : memref<1x8x256xf32, #tpu.memory_space<vmem>>, vector<1x8x256xf32>,
    return
  }
  func.func @transform_0(%arg0: i32) -> (i32, i32, i32) {
    %c0_i32 = arith.constant 0 : i32
    %c0_i32_0 = arith.constant 0 : i32
    %c0_i32_1 = arith.constant 0 : i32
    return %arg0, %c0_i32, %c0_i32_0 : i32, i32, i32
  }
  func.func @transform_1(%arg0: i32) -> (i32, i32, i32) {
    %c0_i32 = arith.constant 0 : i32
    %c0_i32_0 = arith.constant 0 : i32
    %c0_i32_1 = arith.constant 0 : i32
    %c0_i32_2 = arith.constant 0 : i32
    return %c0_i32, %c0_i32_0, %c0_i32_1 : i32, i32, i32
  }
  func.func @transform_2(%arg0: i32) -> (i32, i32, i32) {
    %c0_i32 = arith.constant 0 : i32
    %c0_i32_0 = arith.constant 0 : i32
    %c0_i32_1 = arith.constant 0 : i32
    return %arg0, %c0_i32, %c0_i32_0 : i32, i32, i32
  }
}

</mosaic_0001>

<llo_original>
// kernel: tpu_custom_call.1
$region0: #{tpu_custom_call.1}
  #allocation0 [shape = 'u32[]', space=smem, size = 0x4, offset = 0x4, fixed_abs, tag = 'smem constant byte address 0x4 - core index']
  #allocation1 [shape = 'u32[144,128]{1,0:T(1,128)}', space=vmem, size = 0x12000, scoped, tag = 'internal scratch']
  %s0 = inlined_call_operand.vmem [shape: f32[2,4,256], index: 0, kind: input, shape index: {}]
  %s1 = inlined_call_operand.vmem [shape: f32[9,8,4], index: 1, kind: input, shape index: {}]
  %s2 = inlined_call_operand.hbm [shape: f32[2,8,256], index: 2, kind: output, shape index: {}]
  %s3 = sld [smem:[#allocation0]]
  $region41: #{tpu_custom_call.1} parent=0
    _
  %s5 = ssub.s32 1, %s3
  %s6 = scalar_select 0, %s5, %s3
  $region1: #{tpu_custom_call.1} parent=0
    #allocation2 [shape = 'u8[16384]{0}', space=vmem, size = 0x4000, scoped, tag = 'output window, operand 0']
    #allocation3 [shape = 's32[2]{0}', space=sflag, size = 0x8, scoped, tag = 'scoped memory for tpu_custom_call.1']
    %7 = vsyncpa [#allocation3], 0
    %s8 = scalar_lea.sflag [#allocation3], 1
    %9 = vsyncpa %s8, 0
    loop: start=0, step=1, limit=4
    $region2: #{tpu_custom_call.1} parent=1 // loop_pre_header
      _
    $region3: #{tpu_custom_call.1} parent=1 // loop_header
      %s11 = sphi 0, %s15
      %p12 = scmp.ge.s32.totalorder %s11, 4
      %s21 = sphi 0, %s23
      %s24 = sphi 0, %s21
      %s25 = sphi 0, %s24
      %s41 = sphi 0, %s25
      %s45 = sphi 0, %s45
      %s47 = sphi 0, %s45
      %s48 = sphi 0, %s47
      %s62 = sphi 0, %s48
      %s68 = sphi 0, %s70
      %s71 = sphi 0, %s68
      %s72 = sphi 0, %s71
      %s88 = sphi 0, %s72
    $region4: #{tpu_custom_call.1} parent=1 // loop_header_branch
      %14 = sbr.rel (%p12) target = $region8
    $region5: #{tpu_custom_call.1} parent=1 // loop_body
      %s16 = ssub.s32 %s11, 1
      %s17 = ssub.s32 %s11, 2
      %s18 = sadd.s32 %s11, 1
      %s19 = ssub.s32 %s11, %s18
      %p20 = scmp.eq.s32.totalorder %s19, 0
      %s22 = sadd.s32 %s21, 1
      %s23 = scalar_select %p20, %s21, %s22
      %p26 = pneg %p20
      %p27 = scmp.eq.s32.totalorder %s11, 1
      %p28 = por %p26, %p27
      %p29 = scmp.ne.s32.totalorder %s21, %s24
      %p30 = scmp.eq.s32.totalorder %s11, 0
      %p31 = por %p29, %p30
      %p32 = scmp.ne.s32.totalorder %s21, %s24
      %p33 = scmp.eq.s32.totalorder %s16, 1
      %p34 = por %p32, %p33
      %p35 = scmp.ne.s32.totalorder %s24, %s25
      %p36 = scmp.eq.s32.totalorder %s16, 0
      %p37 = por %p35, %p36
      %p38 = scmp.ne.s32.totalorder %s24, %s25
      %p39 = scmp.eq.s32.totalorder %s17, 1
      %p40 = por %p38, %p39
      %p42 = scmp.ne.s32.totalorder %s25, %s41
      %p43 = scmp.eq.s32.totalorder %s17, 0
      %p44 = por %p42, %p43
      %s46 = sadd.s32 %s45, 1
      %p49 = scmp.eq.s32.totalorder %s11, 1
      %p50 = scmp.ne.s32.totalorder %s45, %s47
      %p51 = scmp.eq.s32.totalorder %s11, 0
      %p52 = por %p50, %p51
      %p53 = scmp.ne.s32.totalorder %s45, %s47
      %p54 = scmp.eq.s32.totalorder %s16, 1
      %p55 = por %p53, %p54
      %p56 = scmp.ne.s32.totalorder %s47, %s48
      %p57 = scmp.eq.s32.totalorder %s16, 0
      %p58 = por %p56, %p57
      %p59 = scmp.ne.s32.totalorder %s47, %s48
      %p60 = scmp.eq.s32.totalorder %s17, 1
      %p61 = por %p59, %p60
      %p63 = scmp.ne.s32.totalorder %s48, %s62
      %p64 = scmp.eq.s32.totalorder %s17, 0
      %p65 = por %p63, %p64
      %s66 = ssub.s32 %s11, %s18
      %p67 = scmp.eq.s32.totalorder %s66, 0
      %s69 = sadd.s32 %s68, 1
      %s70 = scalar_select %p67, %s68, %s69
      %p73 = pneg %p67
      %p74 = scmp.eq.s32.totalorder %s11, 1
      %p75 = por %p73, %p74
      %p76 = scmp.ne.s32.totalorder %s68, %s71
      %p77 = scmp.eq.s32.totalorder %s11, 0
      %p78 = por %p76, %p77
      %p79 = scmp.ne.s32.totalorder %s68, %s71
      %p80 = scmp.eq.s32.totalorder %s16, 1
      %p81 = por %p79, %p80
      %p82 = scmp.ne.s32.totalorder %s71, %s72
      %p83 = scmp.eq.s32.totalorder %s16, 0
      %p84 = por %p82, %p83
      %p85 = scmp.ne.s32.totalorder %s71, %s72
      %p86 = scmp.eq.s32.totalorder %s17, 1
      %p87 = por %p85, %p86
      %p89 = scmp.ne.s32.totalorder %s72, %s88
      %p90 = scmp.eq.s32.totalorder %s17, 0
      %p91 = por %p89, %p90
      %p92 = scmp.le.s32.totalorder 1, %s11
      %p93 = scmp.lt.s32.totalorder %s11, 3
      %p94 = pnand %p92, %p93
      %p95 = pneg %p94
      // Predicated region
      $region9: #{tpu_custom_call.1} parent=5 // pred_check
        _
      $region10: #{tpu_custom_call.1} parent=5 // pred_check_branch
        %97 = sbr.rel (%p94) target = $region12
      $region11: #{tpu_custom_call.1} parent=5 // pred_region
        %s98 = ssub.s32 %s11, 1
        // Predicated region
        $region13: #{tpu_custom_call.1} parent=11 // pred_check
          %p99 = pneg %p58
        $region14: #{tpu_custom_call.1} parent=11 // pred_check_branch
          %101 = sbr.rel (%p99) target = $region16
        $region15: #{tpu_custom_call.1} parent=11 // pred_region
          _
        $region16: #{tpu_custom_call.1} parent=11 // pred_fallthru
          _
      $region12: #{tpu_custom_call.1} parent=5 // pred_fallthru
        _
      %p102 = scmp.lt.s32.totalorder %s11, 2
      // Predicated region
      $region17: #{tpu_custom_call.1} parent=5 // pred_check
        %p103 = pneg %p102
      $region18: #{tpu_custom_call.1} parent=5 // pred_check_branch
        %105 = sbr.rel (%p103) target = $region20
      $region19: #{tpu_custom_call.1} parent=5 // pred_region
        // Predicated region
        $region21: #{tpu_custom_call.1} parent=19 // pred_check
          %p106 = pneg %p31
        $region22: #{tpu_custom_call.1} parent=19 // pred_check_branch
          %108 = sbr.rel (%p106) target = $region24
        $region23: #{tpu_custom_call.1} parent=19 // pred_region
          %p109 = scmp.lt.s32.totalorder %s11, 1
          %s110 = scalar_select %p109, %s11, 1
          %s111 = smul.addr %s110, 2
          %s112 = smul.addr %s111, 4
          %s113 = scalar_lea.vmem %s0, %s112
        $region24: #{tpu_custom_call.1} parent=19 // pred_fallthru
          _
      $region20: #{tpu_custom_call.1} parent=5 // pred_fallthru
        _
      %p114 = scmp.le.s32.totalorder 1, %s11
      %p115 = scmp.lt.s32.totalorder %s11, 3
      %p116 = pnand %p114, %p115
      %p117 = pneg %p116
      // Predicated region
      $region25: #{tpu_custom_call.1} parent=5 // pred_check
        _
      $region26: #{tpu_custom_call.1} parent=5 // pred_check_branch
        %119 = sbr.rel (%p116) target = $region28
      $region27: #{tpu_custom_call.1} parent=5 // pred_region
        %s120 = ssub.s32 %s11, 1
        %p121 = scmp.lt.s32.totalorder %s16, 1
        %s122 = scalar_select %p121, %s16, 1
        %s123 = smul.addr %s122, 2
        %s124 = smul.addr %s123, 4
        %s125 = scalar_lea.vmem %s0, %s124
        %p126 = pneg %p37
        %p127 = pneg %p34
        %p128 = pneg %p58
        %p129 = pneg %p55
        %p130 = pneg %p84
        %p131 = pneg %p81
        %s132 = sand.u32 %s71, 1
        %s133 = scalar_lea.sflag [#allocation3], %s132
        %s134 = sand.u32 %s71, 1
        %s135 = smul.addr %s134, 16
        %s136 = scalar_lea.vmem [#allocation2], %s135
        %p137 = scmp.lt.s32.totalorder %s16, 1
        %s138 = scalar_select %p137, %s16, 1
        %s139 = smul.addr %s138, 2
        %s140 = smul.addr %s139, 4
        %s141 = scalar_lea.vmem %s0, %s140
        %v142 = vld [vmem:[%s141] sm:$0xff]
        %v143 = vlaneseq
        %v144 = vand.u32 %v143, 127
        %v145 = vadd.s32 %v144, 128
        %vm146 = vcmp.lt.s32.totalorder %v144, 0
        %v147 = vsub.s32 0, %v144
        %v148 = vsel %vm146, %v147, %v144
        %v149 = vshrl.u32 %v148, 4
        %v150 = vand.u32 %v148, 15
        %v151 = vsub.s32 0, %v150
        %v152 = vsel %vm146, %v151, %v150
        %vm153 = vcmp.lt.s32.totalorder %v145, 0
        %v154 = vsub.s32 0, %v145
        %v155 = vsel %vm153, %v154, %v145
        %v156 = vshrl.u32 %v155, 4
        %v157 = vand.u32 %v155, 15
        %v158 = vsub.s32 0, %v157
        %v159 = vsel %vm153, %v158, %v157
        %vm160 = vcmp.ne.s32.totalorder %v152, 0
        %vm161 = vcmp.ne.s32.totalorder %v159, 0
        %vm162 = vcmp.lt.s32.totalorder %v152, 0
        %vm163 = vcmp.lt.s32.totalorder %v159, 0
        %vm164 = vmand %vm162, %vm160
        %vm165 = vmand %vm163, %vm161
        %v166 = vadd.s32 %v152, 16
        %v167 = vadd.s32 %v159, 16
        %v168 = vsel %vm164, %v166, %v152
        %v169 = vsel %vm165, %v167, %v159
        %vm170 = vcmp.eq.s32.totalorder %v168, 0
        %vm171 = vcmp.eq.s32.totalorder %v169, 0
        %v173 = vcombine.high %v142, %v142
        %175 = vrot.lane.b32.xlu0 %v142, 113
        %v176 = vpop.permute.xlu0 %175
        %177 = vrot.lane.b32.xlu0 %v173, 113
        %v178 = vpop.permute.xlu0 %177
        %vm179 = vcmp.lt.s32.totalorder %v144, 113
        %v180 = vsel %vm179, %v176, %v178
        %v181 = vsel %vm179, %v178, %v176
        %182 = vrot.lane.b32.xlu0 %v142, 1
        %v183 = vpop.permute.xlu0 %182
        %184 = vrot.lane.b32.xlu0 %v173, 1
        %v185 = vpop.permute.xlu0 %184
        %vm186 = vcmp.lt.s32.totalorder %v144, 1
        %v187 = vsel %vm186, %v183, %v185
        %v188 = vsel %vm186, %v185, %v183
        %v189 = vsel %vm170, %v180, %v188
        %v190 = vsel %vm171, %v181, %v187
        %vm191 = vcmp.eq.s32.totalorder %v168, 15
        %vm192 = vcmp.eq.s32.totalorder %v169, 15
        %193 = vrot.lane.b32.xlu0 %v142, 15
        %v194 = vpop.permute.xlu0 %193
        %195 = vrot.lane.b32.xlu0 %v173, 15
        %v196 = vpop.permute.xlu0 %195
        %vm197 = vcmp.lt.s32.totalorder %v144, 15
        %v198 = vsel %vm197, %v194, %v196
        %v199 = vsel %vm197, %v196, %v194
        %200 = vrot.lane.b32.xlu0 %v142, 127
        %v201 = vpop.permute.xlu0 %200
        %202 = vrot.lane.b32.xlu0 %v173, 127
        %v203 = vpop.permute.xlu0 %202
        %vm204 = vcmp.lt.s32.totalorder %v144, 127
        %v205 = vsel %vm204, %v201, %v203
        %v206 = vsel %vm204, %v203, %v201
        %v207 = vsel %vm191, %v199, %v205
        %v208 = vsel %vm192, %v198, %v206
        %209 = vrot.lane.b32.xlu0 %v189, 16
        %v210 = vpop.permute.xlu0 %209
        %211 = vrot.lane.b32.xlu0 %v190, 16
        %v212 = vpop.permute.xlu0 %211
        %vm213 = vcmp.lt.s32.totalorder %v144, 16
        %v214 = vsel %vm213, %v210, %v212
        %v215 = vsel %vm213, %v212, %v210
        %v216 = vld [vmem:[%s1] sm:$0xff]
        %217 = vrot.lane.b32.xlu0 %v142, 16
        %v218 = vpop.permute.xlu0 %217
        %219 = vrot.lane.b32.xlu0 %v173, 16
        %v220 = vpop.permute.xlu0 %219
        %v221 = vsel %vm213, %v218, %v220
        %v222 = vsel %vm213, %v220, %v218
        %s223 = scalar_lea.vmem %s1, 8
        %v224 = vld [vmem:[%s223] sm:$0xff]
        %vm225 = vcmask 31744
        %v227 = vsel %vm225, %v224, 0
        %vm229 = vcmask 1043456
        %v231 = vsel %vm229, %v222, 0
        %v234 = vsel %vm229, %v221, 0
        %236 = vmatprep.subr.mxu0 %v234
        %237 = vmatpush1.msra.mxu0 %v231
        %238 = vmatprep.subr.mxu0 0.0
        %239 = vmatpush1.msra.mxu0 0.0
        %240 = vmatprep.subr.mxu0 0.0
        %241 = vmatpush1.msra.mxu0 0.0
        %242 = vmatprep.subr.mxu0 0.0
        %243 = vmatpush1.msra.mxu0 0.0
        %244 = vmatprep.subr.mxu0 0.0
        %245 = vmatpush1.msra.mxu0 0.0
        %246 = vmatprep.subr.mxu0 0.0
        %247 = vmatpush1.msra.mxu0 0.0
        %248 = vmatprep.subr.mxu0 0.0
        %249 = vmatpush1.msra.mxu0 0.0
        %250 = vmatprep.subr.mxu0 0.0
        %251 = vmatpush1.msra.mxu0 0.0
        %252 = vmatprep.subr.mxu0 0.0
        %253 = vmatpush1.msra.mxu0 0.0
        %254 = vmatprep.subr.mxu0 0.0
        %255 = vmatpush1.msra.mxu0 0.0
        %256 = vmatprep.subr.mxu0 0.0
        %257 = vmatpush1.msra.mxu0 0.0
        %258 = vmatprep.subr.mxu0 0.0
        %259 = vmatpush1.msra.mxu0 0.0
        %260 = vmatprep.subr.mxu0 0.0
        %261 = vmatpush1.msra.mxu0 0.0
        %262 = vmatprep.subr.mxu0 0.0
        %263 = vmatpush1.msra.mxu0 0.0
        %264 = vmatprep.subr.mxu0 0.0
        %265 = vmatpush1.msra.mxu0 0.0
        %266 = vmatprep.subr.mxu0 0.0
        %267 = vmatpush1.msra.mxu0 0.0
        %268 = vmatprep.subr.mxu0 0.0
        %269 = vmatpush1.msra.mxu0 0.0
        %270 = vmatprep.subr.mxu0 0.0
        %271 = vmatpush1.msra.mxu0 0.0
        %272 = vmatprep.subr.mxu0 0.0
        %273 = vmatpush1.msra.mxu0 0.0
        %274 = vmatprep.subr.mxu0 0.0
        %275 = vmatpush1.msra.mxu0 0.0
        %276 = vmatprep.subr.mxu0 0.0
        %277 = vmatpush1.msra.mxu0 0.0
        %278 = vmatprep.subr.mxu0 0.0
        %279 = vmatpush1.msra.mxu0 0.0
        %280 = vmatprep.subr.mxu0 0.0
        %281 = vmatpush1.msra.mxu0 0.0
        %282 = vmatprep.subr.mxu0 0.0
        %283 = vmatpush1.msra.mxu0 0.0
        %284 = vmatprep.subr.mxu0 0.0
        %285 = vmatpush1.msra.mxu0 0.0
        %286 = vmatprep.subr.mxu0 0.0
        %287 = vmatpush1.msra.mxu0 0.0
        %288 = vmatprep.subr.mxu0 0.0
        %289 = vmatpush1.msra.mxu0 0.0
        %290 = vmatprep.subr.mxu0 0.0
        %291 = vmatpush1.msra.mxu0 0.0
        %292 = vmatprep.subr.mxu0 0.0
        %293 = vmatpush1.msra.mxu0 0.0
        %294 = vmatprep.subr.mxu0 0.0
        %295 = vmatpush1.msra.mxu0 0.0
        %296 = vmatprep.subr.mxu0 0.0
        %297 = vmatpush1.msra.mxu0 0.0
        %298 = vmatprep.subr.mxu0 0.0
        %299 = vmatpush1.msra.mxu0 0.0
        %300 = vmatprep.mubr.f32.mxu0 0.0
        %301 = vmatmul.mubr.f32.gmra.mrb[0].mxu0 %v227
        %v302 = vpop.f32.mrb[0].mxu0
        %v303 = vadd.f32 0.0, %v302
        %v304 = vpop.f32.mrb[0].mxu0
        %v305 = vadd.f32 0.0, %v304
        %306 = vdwg.mxu0
        %v308 = vsel %vm225, %v216, 0
        %v311 = vsel %vm229, %v215, 0
        %v314 = vsel %vm229, %v214, 0
        %316 = vmatprep.subr.mxu0 %v314
        %317 = vmatpush1.msra.mxu0 %v311
        %318 = vmatprep.subr.mxu0 0.0
        %319 = vmatpush1.msra.mxu0 0.0
        %320 = vmatprep.subr.mxu0 0.0
        %321 = vmatpush1.msra.mxu0 0.0
        %322 = vmatprep.subr.mxu0 0.0
        %323 = vmatpush1.msra.mxu0 0.0
        %324 = vmatprep.subr.mxu0 0.0
        %325 = vmatpush1.msra.mxu0 0.0
        %326 = vmatprep.subr.mxu0 0.0
        %327 = vmatpush1.msra.mxu0 0.0
        %328 = vmatprep.subr.mxu0 0.0
        %329 = vmatpush1.msra.mxu0 0.0
        %330 = vmatprep.subr.mxu0 0.0
        %331 = vmatpush1.msra.mxu0 0.0
        %332 = vmatprep.subr.mxu0 0.0
        %333 = vmatpush1.msra.mxu0 0.0
        %334 = vmatprep.subr.mxu0 0.0
        %335 = vmatpush1.msra.mxu0 0.0
        %336 = vmatprep.subr.mxu0 0.0
        %337 = vmatpush1.msra.mxu0 0.0
        %338 = vmatprep.subr.mxu0 0.0
        %339 = vmatpush1.msra.mxu0 0.0
        %340 = vmatprep.subr.mxu0 0.0
        %341 = vmatpush1.msra.mxu0 0.0
        %342 = vmatprep.subr.mxu0 0.0
        %343 = vmatpush1.msra.mxu0 0.0
        %344 = vmatprep.subr.mxu0 0.0
        %345 = vmatpush1.msra.mxu0 0.0
        %346 = vmatprep.subr.mxu0 0.0
        %347 = vmatpush1.msra.mxu0 0.0
        %348 = vmatprep.subr.mxu0 0.0
        %349 = vmatpush1.msra.mxu0 0.0
        %350 = vmatprep.subr.mxu0 0.0
        %351 = vmatpush1.msra.mxu0 0.0
        %352 = vmatprep.subr.mxu0 0.0
        %353 = vmatpush1.msra.mxu0 0.0
        %354 = vmatprep.subr.mxu0 0.0
        %355 = vmatpush1.msra.mxu0 0.0
        %356 = vmatprep.subr.mxu0 0.0
        %357 = vmatpush1.msra.mxu0 0.0
        %358 = vmatprep.subr.mxu0 0.0
        %359 = vmatpush1.msra.mxu0 0.0
        %360 = vmatprep.subr.mxu0 0.0
        %361 = vmatpush1.msra.mxu0 0.0
        %362 = vmatprep.subr.mxu0 0.0
        %363 = vmatpush1.msra.mxu0 0.0
        %364 = vmatprep.subr.mxu0 0.0
        %365 = vmatpush1.msra.mxu0 0.0
        %366 = vmatprep.subr.mxu0 0.0
        %367 = vmatpush1.msra.mxu0 0.0
        %368 = vmatprep.subr.mxu0 0.0
        %369 = vmatpush1.msra.mxu0 0.0
        %370 = vmatprep.subr.mxu0 0.0
        %371 = vmatpush1.msra.mxu0 0.0
        %372 = vmatprep.subr.mxu0 0.0
        %373 = vmatpush1.msra.mxu0 0.0
        %374 = vmatprep.subr.mxu0 0.0
        %375 = vmatpush1.msra.mxu0 0.0
        %376 = vmatprep.subr.mxu0 0.0
        %377 = vmatpush1.msra.mxu0 0.0
        %378 = vmatprep.subr.mxu0 0.0
        %379 = vmatpush1.msra.mxu0 0.0
        %380 = vmatprep.mubr.f32.mxu0 0.0
        %381 = vmatmul.mubr.f32.gmra.mrb[0].mxu0 %v308
        %v382 = vpop.f32.mrb[0].mxu0
        %v383 = vadd.f32 %v303, %v382
        %v384 = vpop.f32.mrb[0].mxu0
        %v385 = vadd.f32 %v305, %v384
        %386 = vdwg.mxu0
        %387 = vrot.lane.b32.xlu0 %v207, 16
        %v388 = vpop.permute.xlu0 %387
        %389 = vrot.lane.b32.xlu0 %v208, 16
        %v390 = vpop.permute.xlu0 %389
        %v391 = vsel %vm213, %v388, %v390
        %v392 = vsel %vm213, %v390, %v388
        %s393 = scalar_lea.vmem %s1, 16
        %v394 = vld [vmem:[%s393] sm:$0xff]
        %v396 = vsel %vm225, %v394, 0
        %v399 = vsel %vm229, %v392, 0
        %v402 = vsel %vm229, %v391, 0
        %404 = vmatprep.subr.mxu0 %v402
        %405 = vmatpush1.msra.mxu0 %v399
        %406 = vmatprep.subr.mxu0 0.0
        %407 = vmatpush1.msra.mxu0 0.0
        %408 = vmatprep.subr.mxu0 0.0
        %409 = vmatpush1.msra.mxu0 0.0
        %410 = vmatprep.subr.mxu0 0.0
        %411 = vmatpush1.msra.mxu0 0.0
        %412 = vmatprep.subr.mxu0 0.0
        %413 = vmatpush1.msra.mxu0 0.0
        %414 = vmatprep.subr.mxu0 0.0
        %415 = vmatpush1.msra.mxu0 0.0
        %416 = vmatprep.subr.mxu0 0.0
        %417 = vmatpush1.msra.mxu0 0.0
        %418 = vmatprep.subr.mxu0 0.0
        %419 = vmatpush1.msra.mxu0 0.0
        %420 = vmatprep.subr.mxu0 0.0
        %421 = vmatpush1.msra.mxu0 0.0
        %422 = vmatprep.subr.mxu0 0.0
        %423 = vmatpush1.msra.mxu0 0.0
        %424 = vmatprep.subr.mxu0 0.0
        %425 = vmatpush1.msra.mxu0 0.0
        %426 = vmatprep.subr.mxu0 0.0
        %427 = vmatpush1.msra.mxu0 0.0
        %428 = vmatprep.subr.mxu0 0.0
        %429 = vmatpush1.msra.mxu0 0.0
        %430 = vmatprep.subr.mxu0 0.0
        %431 = vmatpush1.msra.mxu0 0.0
        %432 = vmatprep.subr.mxu0 0.0
        %433 = vmatpush1.msra.mxu0 0.0
        %434 = vmatprep.subr.mxu0 0.0
        %435 = vmatpush1.msra.mxu0 0.0
        %436 = vmatprep.subr.mxu0 0.0
        %437 = vmatpush1.msra.mxu0 0.0
        %438 = vmatprep.subr.mxu0 0.0
        %439 = vmatpush1.msra.mxu0 0.0
        %440 = vmatprep.subr.mxu0 0.0
        %441 = vmatpush1.msra.mxu0 0.0
        %442 = vmatprep.subr.mxu0 0.0
        %443 = vmatpush1.msra.mxu0 0.0
        %444 = vmatprep.subr.mxu0 0.0
        %445 = vmatpush1.msra.mxu0 0.0
        %446 = vmatprep.subr.mxu0 0.0
        %447 = vmatpush1.msra.mxu0 0.0
        %448 = vmatprep.subr.mxu0 0.0
        %449 = vmatpush1.msra.mxu0 0.0
        %450 = vmatprep.subr.mxu0 0.0
        %451 = vmatpush1.msra.mxu0 0.0
        %452 = vmatprep.subr.mxu0 0.0
        %453 = vmatpush1.msra.mxu0 0.0
        %454 = vmatprep.subr.mxu0 0.0
        %455 = vmatpush1.msra.mxu0 0.0
        %456 = vmatprep.subr.mxu0 0.0
        %457 = vmatpush1.msra.mxu0 0.0
        %458 = vmatprep.subr.mxu0 0.0
        %459 = vmatpush1.msra.mxu0 0.0
        %460 = vmatprep.subr.mxu0 0.0
        %461 = vmatpush1.msra.mxu0 0.0
        %462 = vmatprep.subr.mxu0 0.0
        %463 = vmatpush1.msra.mxu0 0.0
        %464 = vmatprep.subr.mxu0 0.0
        %465 = vmatpush1.msra.mxu0 0.0
        %466 = vmatprep.subr.mxu0 0.0
        %467 = vmatpush1.msra.mxu0 0.0
        %468 = vmatprep.mubr.f32.mxu0 0.0
        %469 = vmatmul.mubr.f32.gmra.mrb[0].mxu0 %v396
        %v470 = vpop.f32.mrb[0].mxu0
        %v471 = vadd.f32 0.0, %v470
        %v472 = vpop.f32.mrb[0].mxu0
        %v473 = vadd.f32 0.0, %v472
        %474 = vdwg.mxu0
        %v475 = vadd.f32 %v383, %v471
        %v476 = vadd.f32 %v385, %v473
        %s477 = scalar_lea.vmem %s1, 24
        %v478 = vld [vmem:[%s477] sm:$0xff]
        %v480 = vsel %vm225, %v478, 0
        %v483 = vsel %vm229, %v189, 0
        %v486 = vsel %vm229, %v190, 0
        %488 = vmatprep.subr.mxu0 %v486
        %489 = vmatpush1.msra.mxu0 %v483
        %490 = vmatprep.subr.mxu0 0.0
        %491 = vmatpush1.msra.mxu0 0.0
        %492 = vmatprep.subr.mxu0 0.0
        %493 = vmatpush1.msra.mxu0 0.0
        %494 = vmatprep.subr.mxu0 0.0
        %495 = vmatpush1.msra.mxu0 0.0
        %496 = vmatprep.subr.mxu0 0.0
        %497 = vmatpush1.msra.mxu0 0.0
        %498 = vmatprep.subr.mxu0 0.0
        %499 = vmatpush1.msra.mxu0 0.0
        %500 = vmatprep.subr.mxu0 0.0
        %501 = vmatpush1.msra.mxu0 0.0
        %502 = vmatprep.subr.mxu0 0.0
        %503 = vmatpush1.msra.mxu0 0.0
        %504 = vmatprep.subr.mxu0 0.0
        %505 = vmatpush1.msra.mxu0 0.0
        %506 = vmatprep.subr.mxu0 0.0
        %507 = vmatpush1.msra.mxu0 0.0
        %508 = vmatprep.subr.mxu0 0.0
        %509 = vmatpush1.msra.mxu0 0.0
        %510 = vmatprep.subr.mxu0 0.0
        %511 = vmatpush1.msra.mxu0 0.0
        %512 = vmatprep.subr.mxu0 0.0
        %513 = vmatpush1.msra.mxu0 0.0
        %514 = vmatprep.subr.mxu0 0.0
        %515 = vmatpush1.msra.mxu0 0.0
        %516 = vmatprep.subr.mxu0 0.0
        %517 = vmatpush1.msra.mxu0 0.0
        %518 = vmatprep.subr.mxu0 0.0
        %519 = vmatpush1.msra.mxu0 0.0
        %520 = vmatprep.subr.mxu0 0.0
        %521 = vmatpush1.msra.mxu0 0.0
        %522 = vmatprep.subr.mxu0 0.0
        %523 = vmatpush1.msra.mxu0 0.0
        %524 = vmatprep.subr.mxu0 0.0
        %525 = vmatpush1.msra.mxu0 0.0
        %526 = vmatprep.subr.mxu0 0.0
        %527 = vmatpush1.msra.mxu0 0.0
        %528 = vmatprep.subr.mxu0 0.0
        %529 = vmatpush1.msra.mxu0 0.0
        %530 = vmatprep.subr.mxu0 0.0
        %531 = vmatpush1.msra.mxu0 0.0
        %532 = vmatprep.subr.mxu0 0.0
        %533 = vmatpush1.msra.mxu0 0.0
        %534 = vmatprep.subr.mxu0 0.0
        %535 = vmatpush1.msra.mxu0 0.0
        %536 = vmatprep.subr.mxu0 0.0
        %537 = vmatpush1.msra.mxu0 0.0
        %538 = vmatprep.subr.mxu0 0.0
        %539 = vmatpush1.msra.mxu0 0.0
        %540 = vmatprep.subr.mxu0 0.0
        %541 = vmatpush1.msra.mxu0 0.0
        %542 = vmatprep.subr.mxu0 0.0
        %543 = vmatpush1.msra.mxu0 0.0
        %544 = vmatprep.subr.mxu0 0.0
        %545 = vmatpush1.msra.mxu0 0.0
        %546 = vmatprep.subr.mxu0 0.0
        %547 = vmatpush1.msra.mxu0 0.0
        %548 = vmatprep.subr.mxu0 0.0
        %549 = vmatpush1.msra.mxu0 0.0
        %550 = vmatprep.subr.mxu0 0.0
        %551 = vmatpush1.msra.mxu0 0.0
        %552 = vmatprep.mubr.f32.mxu0 0.0
        %553 = vmatmul.mubr.f32.gmra.mrb[0].mxu0 %v480
        %v554 = vpop.f32.mrb[0].mxu0
        %v555 = vadd.f32 0.0, %v554
        %v556 = vpop.f32.mrb[0].mxu0
        %v557 = vadd.f32 0.0, %v556
        %558 = vdwg.mxu0
        %v559 = vadd.f32 %v475, %v555
        %v560 = vadd.f32 %v476, %v557
        %s561 = scalar_lea.vmem %s1, 32
        %v562 = vld [vmem:[%s561] sm:$0xff]
        %v564 = vsel %vm225, %v562, 0
        %v566 = vsel %vm229, %v142, 0
        %v568 = vsel %vm229, %v173, 0
        %570 = vmatprep.subr.mxu0 %v568
        %571 = vmatpush1.msra.mxu0 %v566
        %572 = vmatprep.subr.mxu0 0.0
        %573 = vmatpush1.msra.mxu0 0.0
        %574 = vmatprep.subr.mxu0 0.0
        %575 = vmatpush1.msra.mxu0 0.0
        %576 = vmatprep.subr.mxu0 0.0
        %577 = vmatpush1.msra.mxu0 0.0
        %578 = vmatprep.subr.mxu0 0.0
        %579 = vmatpush1.msra.mxu0 0.0
        %580 = vmatprep.subr.mxu0 0.0
        %581 = vmatpush1.msra.mxu0 0.0
        %582 = vmatprep.subr.mxu0 0.0
        %583 = vmatpush1.msra.mxu0 0.0
        %584 = vmatprep.subr.mxu0 0.0
        %585 = vmatpush1.msra.mxu0 0.0
        %586 = vmatprep.subr.mxu0 0.0
        %587 = vmatpush1.msra.mxu0 0.0
        %588 = vmatprep.subr.mxu0 0.0
        %589 = vmatpush1.msra.mxu0 0.0
        %590 = vmatprep.subr.mxu0 0.0
        %591 = vmatpush1.msra.mxu0 0.0
        %592 = vmatprep.subr.mxu0 0.0
        %593 = vmatpush1.msra.mxu0 0.0
        %594 = vmatprep.subr.mxu0 0.0
        %595 = vmatpush1.msra.mxu0 0.0
        %596 = vmatprep.subr.mxu0 0.0
        %597 = vmatpush1.msra.mxu0 0.0
        %598 = vmatprep.subr.mxu0 0.0
        %599 = vmatpush1.msra.mxu0 0.0
        %600 = vmatprep.subr.mxu0 0.0
        %601 = vmatpush1.msra.mxu0 0.0
        %602 = vmatprep.subr.mxu0 0.0
        %603 = vmatpush1.msra.mxu0 0.0
        %604 = vmatprep.subr.mxu0 0.0
        %605 = vmatpush1.msra.mxu0 0.0
        %606 = vmatprep.subr.mxu0 0.0
        %607 = vmatpush1.msra.mxu0 0.0
        %608 = vmatprep.subr.mxu0 0.0
        %609 = vmatpush1.msra.mxu0 0.0
        %610 = vmatprep.subr.mxu0 0.0
        %611 = vmatpush1.msra.mxu0 0.0
        %612 = vmatprep.subr.mxu0 0.0
        %613 = vmatpush1.msra.mxu0 0.0
        %614 = vmatprep.subr.mxu0 0.0
        %615 = vmatpush1.msra.mxu0 0.0
        %616 = vmatprep.subr.mxu0 0.0
        %617 = vmatpush1.msra.mxu0 0.0
        %618 = vmatprep.subr.mxu0 0.0
        %619 = vmatpush1.msra.mxu0 0.0
        %620 = vmatprep.subr.mxu0 0.0
        %621 = vmatpush1.msra.mxu0 0.0
        %622 = vmatprep.subr.mxu0 0.0
        %623 = vmatpush1.msra.mxu0 0.0
        %624 = vmatprep.subr.mxu0 0.0
        %625 = vmatpush1.msra.mxu0 0.0
        %626 = vmatprep.subr.mxu0 0.0
        %627 = vmatpush1.msra.mxu0 0.0
        %628 = vmatprep.subr.mxu0 0.0
        %629 = vmatpush1.msra.mxu0 0.0
        %630 = vmatprep.subr.mxu0 0.0
        %631 = vmatpush1.msra.mxu0 0.0
        %632 = vmatprep.subr.mxu0 0.0
        %633 = vmatpush1.msra.mxu0 0.0
        %634 = vmatprep.mubr.f32.mxu0 0.0
        %635 = vmatmul.mubr.f32.gmra.mrb[0].mxu0 %v564
        %v636 = vpop.f32.mrb[0].mxu0
        %v637 = vadd.f32 0.0, %v636
        %v638 = vpop.f32.mrb[0].mxu0
        %v639 = vadd.f32 0.0, %v638
        %640 = vdwg.mxu0
        %v641 = vadd.f32 %v559, %v637
        %v642 = vadd.f32 %v560, %v639
        %s643 = scalar_lea.vmem %s1, 40
        %v644 = vld [vmem:[%s643] sm:$0xff]
        %v646 = vsel %vm225, %v644, 0
        %v649 = vsel %vm229, %v207, 0
        %v652 = vsel %vm229, %v208, 0
        %654 = vmatprep.subr.mxu0 %v652
        %655 = vmatpush1.msra.mxu0 %v649
        %656 = vmatprep.subr.mxu0 0.0
        %657 = vmatpush1.msra.mxu0 0.0
        %658 = vmatprep.subr.mxu0 0.0
        %659 = vmatpush1.msra.mxu0 0.0
        %660 = vmatprep.subr.mxu0 0.0
        %661 = vmatpush1.msra.mxu0 0.0
        %662 = vmatprep.subr.mxu0 0.0
        %663 = vmatpush1.msra.mxu0 0.0
        %664 = vmatprep.subr.mxu0 0.0
        %665 = vmatpush1.msra.mxu0 0.0
        %666 = vmatprep.subr.mxu0 0.0
        %667 = vmatpush1.msra.mxu0 0.0
        %668 = vmatprep.subr.mxu0 0.0
        %669 = vmatpush1.msra.mxu0 0.0
        %670 = vmatprep.subr.mxu0 0.0
        %671 = vmatpush1.msra.mxu0 0.0
        %672 = vmatprep.subr.mxu0 0.0
        %673 = vmatpush1.msra.mxu0 0.0
        %674 = vmatprep.subr.mxu0 0.0
        %675 = vmatpush1.msra.mxu0 0.0
        %676 = vmatprep.subr.mxu0 0.0
        %677 = vmatpush1.msra.mxu0 0.0
        %678 = vmatprep.subr.mxu0 0.0
        %679 = vmatpush1.msra.mxu0 0.0
        %680 = vmatprep.subr.mxu0 0.0
        %681 = vmatpush1.msra.mxu0 0.0
        %682 = vmatprep.subr.mxu0 0.0
        %683 = vmatpush1.msra.mxu0 0.0
        %684 = vmatprep.subr.mxu0 0.0
        %685 = vmatpush1.msra.mxu0 0.0
        %686 = vmatprep.subr.mxu0 0.0
        %687 = vmatpush1.msra.mxu0 0.0
        %688 = vmatprep.subr.mxu0 0.0
        %689 = vmatpush1.msra.mxu0 0.0
        %690 = vmatprep.subr.mxu0 0.0
        %691 = vmatpush1.msra.mxu0 0.0
        %692 = vmatprep.subr.mxu0 0.0
        %693 = vmatpush1.msra.mxu0 0.0
        %694 = vmatprep.subr.mxu0 0.0
        %695 = vmatpush1.msra.mxu0 0.0
        %696 = vmatprep.subr.mxu0 0.0
        %697 = vmatpush1.msra.mxu0 0.0
        %698 = vmatprep.subr.mxu0 0.0
        %699 = vmatpush1.msra.mxu0 0.0
        %700 = vmatprep.subr.mxu0 0.0
        %701 = vmatpush1.msra.mxu0 0.0
        %702 = vmatprep.subr.mxu0 0.0
        %703 = vmatpush1.msra.mxu0 0.0
        %704 = vmatprep.subr.mxu0 0.0
        %705 = vmatpush1.msra.mxu0 0.0
        %706 = vmatprep.subr.mxu0 0.0
        %707 = vmatpush1.msra.mxu0 0.0
        %708 = vmatprep.subr.mxu0 0.0
        %709 = vmatpush1.msra.mxu0 0.0
        %710 = vmatprep.subr.mxu0 0.0
        %711 = vmatpush1.msra.mxu0 0.0
        %712 = vmatprep.subr.mxu0 0.0
        %713 = vmatpush1.msra.mxu0 0.0
        %714 = vmatprep.subr.mxu0 0.0
        %715 = vmatpush1.msra.mxu0 0.0
        %716 = vmatprep.subr.mxu0 0.0
        %717 = vmatpush1.msra.mxu0 0.0
        %718 = vmatprep.mubr.f32.mxu0 0.0
        %719 = vmatmul.mubr.f32.gmra.mrb[0].mxu0 %v646
        %v720 = vpop.f32.mrb[0].mxu0
        %v721 = vadd.f32 0.0, %v720
        %v722 = vpop.f32.mrb[0].mxu0
        %v723 = vadd.f32 0.0, %v722
        %724 = vdwg.mxu0
        %v725 = vadd.f32 %v641, %v721
        %v726 = vadd.f32 %v642, %v723
        %727 = vrot.lane.b32.xlu0 %v189, 112
        %v728 = vpop.permute.xlu0 %727
        %729 = vrot.lane.b32.xlu0 %v190, 112
        %v730 = vpop.permute.xlu0 %729
        %vm731 = vcmp.lt.s32.totalorder %v144, 112
        %v732 = vsel %vm731, %v728, %v730
        %v733 = vsel %vm731, %v730, %v728
        %s734 = scalar_lea.vmem %s1, 48
        %v735 = vld [vmem:[%s734] sm:$0xff]
        %v737 = vsel %vm225, %v735, 0
        %v740 = vsel %vm229, %v732, 0
        %v743 = vsel %vm229, %v733, 0
        %745 = vmatprep.subr.mxu0 %v743
        %746 = vmatpush1.msra.mxu0 %v740
        %747 = vmatprep.subr.mxu0 0.0
        %748 = vmatpush1.msra.mxu0 0.0
        %749 = vmatprep.subr.mxu0 0.0
        %750 = vmatpush1.msra.mxu0 0.0
        %751 = vmatprep.subr.mxu0 0.0
        %752 = vmatpush1.msra.mxu0 0.0
        %753 = vmatprep.subr.mxu0 0.0
        %754 = vmatpush1.msra.mxu0 0.0
        %755 = vmatprep.subr.mxu0 0.0
        %756 = vmatpush1.msra.mxu0 0.0
        %757 = vmatprep.subr.mxu0 0.0
        %758 = vmatpush1.msra.mxu0 0.0
        %759 = vmatprep.subr.mxu0 0.0
        %760 = vmatpush1.msra.mxu0 0.0
        %761 = vmatprep.subr.mxu0 0.0
        %762 = vmatpush1.msra.mxu0 0.0
        %763 = vmatprep.subr.mxu0 0.0
        %764 = vmatpush1.msra.mxu0 0.0
        %765 = vmatprep.subr.mxu0 0.0
        %766 = vmatpush1.msra.mxu0 0.0
        %767 = vmatprep.subr.mxu0 0.0
        %768 = vmatpush1.msra.mxu0 0.0
        %769 = vmatprep.subr.mxu0 0.0
        %770 = vmatpush1.msra.mxu0 0.0
        %771 = vmatprep.subr.mxu0 0.0
        %772 = vmatpush1.msra.mxu0 0.0
        %773 = vmatprep.subr.mxu0 0.0
        %774 = vmatpush1.msra.mxu0 0.0
        %775 = vmatprep.subr.mxu0 0.0
        %776 = vmatpush1.msra.mxu0 0.0
        %777 = vmatprep.subr.mxu0 0.0
        %778 = vmatpush1.msra.mxu0 0.0
        %779 = vmatprep.subr.mxu0 0.0
        %780 = vmatpush1.msra.mxu0 0.0
        %781 = vmatprep.subr.mxu0 0.0
        %782 = vmatpush1.msra.mxu0 0.0
        %783 = vmatprep.subr.mxu0 0.0
        %784 = vmatpush1.msra.mxu0 0.0
        %785 = vmatprep.subr.mxu0 0.0
        %786 = vmatpush1.msra.mxu0 0.0
        %787 = vmatprep.subr.mxu0 0.0
        %788 = vmatpush1.msra.mxu0 0.0
        %789 = vmatprep.subr.mxu0 0.0
        %790 = vmatpush1.msra.mxu0 0.0
        %791 = vmatprep.subr.mxu0 0.0
        %792 = vmatpush1.msra.mxu0 0.0
        %793 = vmatprep.subr.mxu0 0.0
        %794 = vmatpush1.msra.mxu0 0.0
        %795 = vmatprep.subr.mxu0 0.0
        %796 = vmatpush1.msra.mxu0 0.0
        %797 = vmatprep.subr.mxu0 0.0
        %798 = vmatpush1.msra.mxu0 0.0
        %799 = vmatprep.subr.mxu0 0.0
        %800 = vmatpush1.msra.mxu0 0.0
        %801 = vmatprep.subr.mxu0 0.0
        %802 = vmatpush1.msra.mxu0 0.0
        %803 = vmatprep.subr.mxu0 0.0
        %804 = vmatpush1.msra.mxu0 0.0
        %805 = vmatprep.subr.mxu0 0.0
        %806 = vmatpush1.msra.mxu0 0.0
        %807 = vmatprep.subr.mxu0 0.0
        %808 = vmatpush1.msra.mxu0 0.0
        %809 = vmatprep.mubr.f32.mxu0 0.0
        %810 = vmatmul.mubr.f32.gmra.mrb[0].mxu0 %v737
        %v811 = vpop.f32.mrb[0].mxu0
        %v812 = vadd.f32 0.0, %v811
        %v813 = vpop.f32.mrb[0].mxu0
        %v814 = vadd.f32 0.0, %v813
        %815 = vdwg.mxu0
        %v816 = vadd.f32 %v725, %v812
        %v817 = vadd.f32 %v726, %v814
        %818 = vrot.lane.b32.xlu0 %v142, 112
        %v819 = vpop.permute.xlu0 %818
        %820 = vrot.lane.b32.xlu0 %v173, 112
        %v821 = vpop.permute.xlu0 %820
        %v822 = vsel %vm731, %v819, %v821
        %v823 = vsel %vm731, %v821, %v819
        %s824 = scalar_lea.vmem %s1, 56
        %v825 = vld [vmem:[%s824] sm:$0xff]
        %v827 = vsel %vm225, %v825, 0
        %v830 = vsel %vm229, %v822, 0
        %v833 = vsel %vm229, %v823, 0
        %835 = vmatprep.subr.mxu0 %v833
        %836 = vmatpush1.msra.mxu0 %v830
        %837 = vmatprep.subr.mxu0 0.0
        %838 = vmatpush1.msra.mxu0 0.0
        %839 = vmatprep.subr.mxu0 0.0
        %840 = vmatpush1.msra.mxu0 0.0
        %841 = vmatprep.subr.mxu0 0.0
        %842 = vmatpush1.msra.mxu0 0.0
        %843 = vmatprep.subr.mxu0 0.0
        %844 = vmatpush1.msra.mxu0 0.0
        %845 = vmatprep.subr.mxu0 0.0
        %846 = vmatpush1.msra.mxu0 0.0
        %847 = vmatprep.subr.mxu0 0.0
        %848 = vmatpush1.msra.mxu0 0.0
        %849 = vmatprep.subr.mxu0 0.0
        %850 = vmatpush1.msra.mxu0 0.0
        %851 = vmatprep.subr.mxu0 0.0
        %852 = vmatpush1.msra.mxu0 0.0
        %853 = vmatprep.subr.mxu0 0.0
        %854 = vmatpush1.msra.mxu0 0.0
        %855 = vmatprep.subr.mxu0 0.0
        %856 = vmatpush1.msra.mxu0 0.0
        %857 = vmatprep.subr.mxu0 0.0
        %858 = vmatpush1.msra.mxu0 0.0
        %859 = vmatprep.subr.mxu0 0.0
        %860 = vmatpush1.msra.mxu0 0.0
        %861 = vmatprep.subr.mxu0 0.0
        %862 = vmatpush1.msra.mxu0 0.0
        %863 = vmatprep.subr.mxu0 0.0
        %864 = vmatpush1.msra.mxu0 0.0
        %865 = vmatprep.subr.mxu0 0.0
        %866 = vmatpush1.msra.mxu0 0.0
        %867 = vmatprep.subr.mxu0 0.0
        %868 = vmatpush1.msra.mxu0 0.0
        %869 = vmatprep.subr.mxu0 0.0
        %870 = vmatpush1.msra.mxu0 0.0
        %871 = vmatprep.subr.mxu0 0.0
        %872 = vmatpush1.msra.mxu0 0.0
        %873 = vmatprep.subr.mxu0 0.0
        %874 = vmatpush1.msra.mxu0 0.0
        %875 = vmatprep.subr.mxu0 0.0
        %876 = vmatpush1.msra.mxu0 0.0
        %877 = vmatprep.subr.mxu0 0.0
        %878 = vmatpush1.msra.mxu0 0.0
        %879 = vmatprep.subr.mxu0 0.0
        %880 = vmatpush1.msra.mxu0 0.0
        %881 = vmatprep.subr.mxu0 0.0
        %882 = vmatpush1.msra.mxu0 0.0
        %883 = vmatprep.subr.mxu0 0.0
        %884 = vmatpush1.msra.mxu0 0.0
        %885 = vmatprep.subr.mxu0 0.0
        %886 = vmatpush1.msra.mxu0 0.0
        %887 = vmatprep.subr.mxu0 0.0
        %888 = vmatpush1.msra.mxu0 0.0
        %889 = vmatprep.subr.mxu0 0.0
        %890 = vmatpush1.msra.mxu0 0.0
        %891 = vmatprep.subr.mxu0 0.0
        %892 = vmatpush1.msra.mxu0 0.0
        %893 = vmatprep.subr.mxu0 0.0
        %894 = vmatpush1.msra.mxu0 0.0
        %895 = vmatprep.subr.mxu0 0.0
        %896 = vmatpush1.msra.mxu0 0.0
        %897 = vmatprep.subr.mxu0 0.0
        %898 = vmatpush1.msra.mxu0 0.0
        %899 = vmatprep.mubr.f32.mxu0 0.0
        %900 = vmatmul.mubr.f32.gmra.mrb[0].mxu0 %v827
        %v901 = vpop.f32.mrb[0].mxu0
        %v902 = vadd.f32 0.0, %v901
        %v903 = vpop.f32.mrb[0].mxu0
        %v904 = vadd.f32 0.0, %v903
        %905 = vdwg.mxu0
        %v906 = vadd.f32 %v816, %v902
        %v907 = vadd.f32 %v817, %v904
        %908 = vrot.lane.b32.xlu0 %v207, 112
        %v909 = vpop.permute.xlu0 %908
        %910 = vrot.lane.b32.xlu0 %v208, 112
        %v911 = vpop.permute.xlu0 %910
        %v912 = vsel %vm731, %v909, %v911
        %v913 = vsel %vm731, %v911, %v909
        %s914 = scalar_lea.vmem %s1, 64
        %v915 = vld [vmem:[%s914] sm:$0xff]
        %v917 = vsel %vm225, %v915, 0
        %v920 = vsel %vm229, %v912, 0
        %v923 = vsel %vm229, %v913, 0
        %925 = vmatprep.subr.mxu0 %v923
        %926 = vmatpush1.msra.mxu0 %v920
        %927 = vmatprep.subr.mxu0 0.0
        %928 = vmatpush1.msra.mxu0 0.0
        %929 = vmatprep.subr.mxu0 0.0
        %930 = vmatpush1.msra.mxu0 0.0
        %931 = vmatprep.subr.mxu0 0.0
        %932 = vmatpush1.msra.mxu0 0.0
        %933 = vmatprep.subr.mxu0 0.0
        %934 = vmatpush1.msra.mxu0 0.0
        %935 = vmatprep.subr.mxu0 0.0
        %936 = vmatpush1.msra.mxu0 0.0
        %937 = vmatprep.subr.mxu0 0.0
        %938 = vmatpush1.msra.mxu0 0.0
        %939 = vmatprep.subr.mxu0 0.0
        %940 = vmatpush1.msra.mxu0 0.0
        %941 = vmatprep.subr.mxu0 0.0
        %942 = vmatpush1.msra.mxu0 0.0
        %943 = vmatprep.subr.mxu0 0.0
        %944 = vmatpush1.msra.mxu0 0.0
        %945 = vmatprep.subr.mxu0 0.0
        %946 = vmatpush1.msra.mxu0 0.0
        %947 = vmatprep.subr.mxu0 0.0
        %948 = vmatpush1.msra.mxu0 0.0
        %949 = vmatprep.subr.mxu0 0.0
        %950 = vmatpush1.msra.mxu0 0.0
        %951 = vmatprep.subr.mxu0 0.0
        %952 = vmatpush1.msra.mxu0 0.0
        %953 = vmatprep.subr.mxu0 0.0
        %954 = vmatpush1.msra.mxu0 0.0
        %955 = vmatprep.subr.mxu0 0.0
        %956 = vmatpush1.msra.mxu0 0.0
        %957 = vmatprep.subr.mxu0 0.0
        %958 = vmatpush1.msra.mxu0 0.0
        %959 = vmatprep.subr.mxu0 0.0
        %960 = vmatpush1.msra.mxu0 0.0
        %961 = vmatprep.subr.mxu0 0.0
        %962 = vmatpush1.msra.mxu0 0.0
        %963 = vmatprep.subr.mxu0 0.0
        %964 = vmatpush1.msra.mxu0 0.0
        %965 = vmatprep.subr.mxu0 0.0
        %966 = vmatpush1.msra.mxu0 0.0
        %967 = vmatprep.subr.mxu0 0.0
        %968 = vmatpush1.msra.mxu0 0.0
        %969 = vmatprep.subr.mxu0 0.0
        %970 = vmatpush1.msra.mxu0 0.0
        %971 = vmatprep.subr.mxu0 0.0
        %972 = vmatpush1.msra.mxu0 0.0
        %973 = vmatprep.subr.mxu0 0.0
        %974 = vmatpush1.msra.mxu0 0.0
        %975 = vmatprep.subr.mxu0 0.0
        %976 = vmatpush1.msra.mxu0 0.0
        %977 = vmatprep.subr.mxu0 0.0
        %978 = vmatpush1.msra.mxu0 0.0
        %979 = vmatprep.subr.mxu0 0.0
        %980 = vmatpush1.msra.mxu0 0.0
        %981 = vmatprep.subr.mxu0 0.0
        %982 = vmatpush1.msra.mxu0 0.0
        %983 = vmatprep.subr.mxu0 0.0
        %984 = vmatpush1.msra.mxu0 0.0
        %985 = vmatprep.subr.mxu0 0.0
        %986 = vmatpush1.msra.mxu0 0.0
        %987 = vmatprep.subr.mxu0 0.0
        %988 = vmatpush1.msra.mxu0 0.0
        %989 = vmatprep.mubr.f32.mxu0 0.0
        %990 = vmatmul.mubr.f32.gmra.mrb[0].mxu0 %v917
        %v991 = vpop.f32.mrb[0].mxu0
        %v992 = vadd.f32 0.0, %v991
        %v993 = vpop.f32.mrb[0].mxu0
        %v994 = vadd.f32 0.0, %v993
        %995 = vdwg.mxu0
        %v996 = vadd.f32 %v906, %v992
        %v997 = vadd.f32 %v907, %v994
        %998 = vst [vmem:[%s136] sm:$0xff] %v996
        %999 = vst [vmem:[%s136 + $0x8] sm:$0xff] %v997
        %s1000 = sand.u32 %s71, 1
        %s1001 = scalar_lea.sflag [#allocation3], %s1000
        %s1002 = sand.u32 %s71, 1
        %s1003 = smul.addr %s1002, 16
        %s1004 = scalar_lea.vmem [#allocation2], %s1003
        // Predicated region
        $region29: #{tpu_custom_call.1} parent=27 // pred_check
          %p1005 = pneg %p81
        $region30: #{tpu_custom_call.1} parent=27 // pred_check_branch
          %1007 = sbr.rel (%p1005) target = $region32
        $region31: #{tpu_custom_call.1} parent=27 // pred_region
          %s1009 = ssub.s32 256, 256
          %1010 = vsyncadd %s1001, %s1009
          %s1011 = smul.addr %s16, 2
          %s1012 = smul.addr %s1011, 128
          %s1013 = scalar_lea.hbm %s2, %s1012
          %s1015 = sshll.u32 %s1004, 4
          %s1016 = int_to_ptr.vmem [resolvable:$true] %s1015
          %1018 = dma.vmem_to_hbm [thread:$0]  %s1016, 256, %s1013, %s1001
        $region32: #{tpu_custom_call.1} parent=27 // pred_fallthru
          _
      $region28: #{tpu_custom_call.1} parent=5 // pred_fallthru
        _
      %p1019 = scmp.le.s32.totalorder 2, %s11
      // Predicated region
      $region33: #{tpu_custom_call.1} parent=5 // pred_check
        %p1020 = pneg %p1019
      $region34: #{tpu_custom_call.1} parent=5 // pred_check_branch
        %1022 = sbr.rel (%p1020) target = $region36
      $region35: #{tpu_custom_call.1} parent=5 // pred_region
        %s1023 = ssub.s32 %s11, 2
        // Predicated region
        $region37: #{tpu_custom_call.1} parent=35 // pred_check
          %p1024 = pneg %p87
        $region38: #{tpu_custom_call.1} parent=35 // pred_check_branch
          %1026 = sbr.rel (%p1024) target = $region40
        $region39: #{tpu_custom_call.1} parent=35 // pred_region
          %s1027 = sand.u32 %s72, 1
          %s1028 = scalar_lea.sflag [#allocation3], %s1027
          %s1029 = sand.u32 %s72, 1
          %s1030 = smul.addr %s1029, 16
          %s1031 = scalar_lea.vmem [#allocation2], %s1030
          %1032 = dma.done %s1028, 256
        $region40: #{tpu_custom_call.1} parent=35 // pred_fallthru
          _
      $region36: #{tpu_custom_call.1} parent=5 // pred_fallthru
        _
    $region6: #{tpu_custom_call.1} parent=1 // loop_footer
      %s15 = sadd.s32 1, %s11
    $region7: #{tpu_custom_call.1} parent=1 // loop_footer_branch
      %10 = sbr.rel target = $region3
    $region8: #{tpu_custom_call.1} parent=1 // loop_exit
      _
    %1033 = vsyncpa [#allocation3], 1
    %s1034 = scalar_lea.sflag [#allocation3], 1
    %1035 = vsyncpa %s1034, 1

</llo_original>
